<compile_context>
chip_gen: v6e
topology: v6e:2x2x1
jax: 0.10.0
libtpu: 0.0.40
codegen_flags: <defaults>
</compile_context>

<pallas_src>
import functools

import jax
import jax.numpy as jnp
from jax.experimental import pallas as pl
from jax.experimental.pallas import tpu as pltpu


def _round_up(x, m):
  return ((x + m - 1) // m) * m


# ----------------------------------------------------------------------------
# Pallas kernel: one batch tile of the full ActorCritic.forward hot path.
# ----------------------------------------------------------------------------
def _ac_forward_kernel(
    # streamed per-batch-tile inputs (original dtype, unpadded feature widths)
    goals_ref, states_ref, memory_ref,
    # VMEM-resident weights / biases (constant index_maps)
    w_es_ref, w_em_ref, b_e_ref,          # encoder, split-K over states|memory
    w_g_ref, b_g_ref,                     # goal encoder
    w_ag_ref, w_ae_ref, b_a_ref,          # actor, split-K over g|enc
    w_cg_ref, w_ce_ref, w_ca_ref, b_c1_ref,  # critic layer 1, split-K over g|enc|mean
    w_c2_ref,                             # critic head row (1, C), f32, VPU
    b_c2_ref,                             # critic head bias, scalar in SMEM
    # outputs
    slab_ref,                             # (TB, A_slab) f32: mean cols + value in last lane
    mem_ref,                              # (TB, H_pad) bf16: new recurrent memory
):
  f32 = jnp.float32
  cdt = w_ag_ref.dtype  # bf16 MXU operand dtype

  st = states_ref[...].astype(cdt)
  mm = memory_ref[...].astype(cdt)
  gl = goals_ref[...].astype(cdt)

  # --- encoder(states, memory): enc = tanh(states@W_es + memory@W_em + b_e) --
  enc = jnp.tanh(
      jnp.dot(st, w_es_ref[...], preferred_element_type=f32)
      + jnp.dot(mm, w_em_ref[...], preferred_element_type=f32)
      + b_e_ref[...])
  mem_ref[...] = enc.astype(mem_ref.dtype)   # recurrent-style: new memory == encoder state
  enc_c = enc.astype(cdt)

  # --- goal_encoder(goals): g = relu(goals @ W_g + b_g) ----------------------
  g = jnp.maximum(
      jnp.dot(gl, w_g_ref[...], preferred_element_type=f32) + b_g_ref[...],
      0.0)
  g_c = g.astype(cdt)

  # --- actor[a_i](g, enc): mean = tanh(g@W_ag + enc@W_ae + b_a) --------------
  mean = jnp.tanh(
      jnp.dot(g_c, w_ag_ref[...], preferred_element_type=f32)
      + jnp.dot(enc_c, w_ae_ref[...], preferred_element_type=f32)
      + b_a_ref[...])

  # --- critic[ind](g, enc, mean): h = relu(g@W_cg + enc@W_ce + mean@W_ca + b) -
  h = jnp.maximum(
      jnp.dot(g_c, w_cg_ref[...], preferred_element_type=f32)
      + jnp.dot(enc_c, w_ce_ref[...], preferred_element_type=f32)
      + jnp.dot(mean.astype(cdt), w_ca_ref[...], preferred_element_type=f32)
      + b_c1_ref[...],
      0.0)

  # Width-1 critic head as VPU multiply + lane reduce (no wasted N=1 MXU pass).
  value = jnp.sum(h * w_c2_ref[...], axis=-1, keepdims=True) + b_c2_ref[0, 0]

  # Lane-dense packed output: value occupies the last lane column of the slab.
  lane = jax.lax.broadcasted_iota(jnp.int32, slab_ref.shape, dimension=1)
  slab_ref[...] = jnp.where(lane == slab_ref.shape[-1] - 1,
                            jnp.broadcast_to(value, slab_ref.shape), mean)


# ----------------------------------------------------------------------------
# Wrapper: synthetic parameters (padded / pre-split at construction) + dispatch.
# ----------------------------------------------------------------------------
class ActorCriticPallas:
  """Synthetic-parameter ActorCritic with a fused, batch-tiled Pallas forward."""

  def __init__(self, key, *, goal_dim, state_dim, memory_dim,
               enc_hidden, goal_hidden, action_dim, critic_hidden,
               n_agents=1, param_dtype=jnp.bfloat16):
    # forward() feeds the encoder state back as the new memory, so widths must agree.
    assert enc_hidden == memory_dim, (
        "new memory == encoder state requires enc_hidden == memory_dim")
    # TODO(synk): the original module reshapes goals/states by n_agents before the
    # actor; only the n_agents == 1 (no-op view) case is implemented here.
    assert n_agents == 1
    self.n_agents = n_agents
    self.param_dtype = param_dtype

    H_pad = _round_up(enc_hidden, 128)
    GH_pad = _round_up(goal_hidden, 128)
    A_slab = _round_up(action_dim + 1, 128)   # +1 reserves a lane for the packed value
    C_pad = _round_up(critic_hidden, 128)
    self.dims = dict(
        goal_dim=goal_dim, state_dim=state_dim, memory_dim=memory_dim,
        enc_hidden=enc_hidden, goal_hidden=goal_hidden, action_dim=action_dim,
        critic_hidden=critic_hidden, H_pad=H_pad, GH_pad=GH_pad,
        A_slab=A_slab, C_pad=C_pad)

    ks = jax.random.split(key, 14)

    def init(k, shape, scale=0.1):
      return (scale * jax.random.normal(k, shape)).astype(jnp.float32)

    w_es = init(ks[0], (state_dim, enc_hidden))
    w_em = init(ks[1], (memory_dim, enc_hidden))
    b_e = init(ks[2], (enc_hidden,))
    w_g = init(ks[3], (goal_dim, goal_hidden))
    b_g = init(ks[4], (goal_hidden,))
    w_ag = init(ks[5], (goal_hidden, action_dim))
    w_ae = init(ks[6], (enc_hidden, action_dim))
    b_a = init(ks[7], (action_dim,))
    w_cg = init(ks[8], (goal_hidden, critic_hidden))
    w_ce = init(ks[9], (enc_hidden, critic_hidden))
    w_ca = init(ks[10], (action_dim, critic_hidden))
    b_c1 = init(ks[11], (critic_hidden,))
    w_c2 = init(ks[12], (critic_hidden, 1))
    b_c2 = init(ks[13], (1, 1))

    # Output (N) dims zero-padded to multiples of 128 so every store / MXU pass
    # is lane-dense; contracting (K) dims keep their natural widths (split-K).
    def pad_w(w, rows, cols):
      out = jnp.zeros((rows, cols), jnp.float32)
      return out.at[:w.shape[0], :w.shape[1]].set(w)

    def pad_b(b, cols):
      return jnp.zeros((1, cols), jnp.float32).at[0, :b.shape[0]].set(b)

    self.params = dict(
        w_es=pad_w(w_es, state_dim, H_pad).astype(param_dtype),
        w_em=pad_w(w_em, memory_dim, H_pad).astype(param_dtype),
        b_e=pad_b(b_e, H_pad),
        w_g=pad_w(w_g, goal_dim, GH_pad).astype(param_dtype),
        b_g=pad_b(b_g, GH_pad),
        w_ag=pad_w(w_ag, GH_pad, A_slab).astype(param_dtype),
        w_ae=pad_w(w_ae, H_pad, A_slab).astype(param_dtype),
        b_a=pad_b(b_a, A_slab),
        w_cg=pad_w(w_cg, GH_pad, C_pad).astype(param_dtype),
        w_ce=pad_w(w_ce, H_pad, C_pad).astype(param_dtype),
        w_ca=pad_w(w_ca, A_slab, C_pad).astype(param_dtype),
        b_c1=pad_b(b_c1, C_pad),
        w_c2=jnp.zeros((1, C_pad), jnp.float32).at[0, :critic_hidden].set(w_c2[:, 0]),
        b_c2=b_c2,                                   # scalar, lives in SMEM
        log_std=jnp.full((1, action_dim), -0.5, jnp.float32),
    )

  def forward(self, goals, states, memory, ind=0, a_i=0, ppo=True):
    # Single synthetic actor/critic head: the original module's ind/a_i select
    # among nn.ModuleList entries, i.e. a static parameter-set choice.
    # TODO(synk): with multiple heads, select the (ind, a_i) parameter set here
    # (host-side, outside the kernel) before dispatching.
    del ind, a_i, ppo
    return self._forward(goals, states, memory)

  @functools.partial(jax.jit, static_argnums=0)
  def _forward(self, goals, states, memory):
    d = self.dims
    p = self.params
    B = states.shape[0]

    # Tile policy: tiles up to 1024 rows (per-step overhead ~0.35us amortized),
    # at least 2 grid steps when the batch allows it so v7x's 2 TensorCores both
    # get work under dimension_semantics=("parallel",), and tail padding stays
    # bounded by 16 * n_tiles rows (no ~2x padded-batch blowups).
    TB_MAX = 1024
    n_tiles = max(2, -(-B // TB_MAX))
    TB = _round_up(-(-B // n_tiles), 16)
    B_pad = _round_up(B, TB)

    def pad_batch(a):
      return jnp.pad(a, ((0, B_pad - B), (0, 0))) if B_pad > B else a

    gl, st, mm = pad_batch(goals), pad_batch(states), pad_batch(memory)

    def row_spec(width):  # streamed activations/outputs: pipelined batch tiles
      return pl.BlockSpec((TB, width), lambda i: (i, 0))

    def resident(arr):    # weights: constant block index -> stay in VMEM
      # TODO(synk): for very large hidden sizes on v7x (64 MiB VMEM), single-buffer
      # these with pipeline_mode=pl.Buffered(1) or add an N-tiled grid axis.
      return pl.BlockSpec(arr.shape, lambda i: (0, 0))

    in_specs = [
        row_spec(goals.shape[1]),                            # goals (unpadded width)
        row_spec(states.shape[1]),                           # states
        row_spec(memory.shape[1]),                           # memory
        resident(p["w_es"]), resident(p["w_em"]), resident(p["b_e"]),
        resident(p["w_g"]), resident(p["b_g"]),
        resident(p["w_ag"]), resident(p["w_ae"]), resident(p["b_a"]),
        resident(p["w_cg"]), resident(p["w_ce"]), resident(p["w_ca"]),
        resident(p["b_c1"]),
        resident(p["w_c2"]),
        pl.BlockSpec(memory_space=pltpu.MemorySpace.SMEM),    # b_c2 scalar
    ]
    out_specs = [row_spec(d["A_slab"]), row_spec(d["H_pad"])]
    out_shape = (
        jax.ShapeDtypeStruct((B_pad, d["A_slab"]), jnp.float32),   # mean|value slab
        jax.ShapeDtypeStruct((B_pad, d["H_pad"]), self.param_dtype),  # new memory (bf16)
    )

    flops = 2 * B_pad * (
        d["state_dim"] * d["H_pad"] + d["memory_dim"] * d["H_pad"]
        + d["goal_dim"] * d["GH_pad"]
        + (d["GH_pad"] + d["H_pad"]) * d["A_slab"]
        + (d["GH_pad"] + d["H_pad"] + d["A_slab"]) * d["C_pad"]
        + d["C_pad"])
    in_bytes = sum(int(a.size) * a.dtype.itemsize for a in (gl, st, mm))
    w_bytes = sum(int(v.size) * v.dtype.itemsize
                  for k, v in p.items() if k != "log_std")
    out_bytes = B_pad * (d["A_slab"] * 4 + d["H_pad"] * 2)
    cost = pl.CostEstimate(
        flops=int(flops),
        transcendentals=int(B_pad * (d["H_pad"] + d["A_slab"])),
        bytes_accessed=int(in_bytes + w_bytes + out_bytes))

    slab, mem = pl.pallas_call(
        _ac_forward_kernel,
        grid=(B_pad // TB,),
        in_specs=in_specs,
        out_specs=out_specs,
        out_shape=out_shape,
        compiler_params=pltpu.CompilerParams(
            dimension_semantics=("parallel",),
            vmem_limit_bytes=32 * 1024 * 1024),
        cost_estimate=cost,
    )(gl, st, mm,
      p["w_es"], p["w_em"], p["b_e"],
      p["w_g"], p["b_g"],
      p["w_ag"], p["w_ae"], p["b_a"],
      p["w_cg"], p["w_ce"], p["w_ca"], p["b_c1"],
      p["w_c2"], p["b_c2"])

    act = d["action_dim"]
    mean = slab[:B, :act]
    value = slab[:B, d["A_slab"] - 1:d["A_slab"]]
    # std = exp(log_std) is batch-independent -> computed outside the kernel.
    std = jnp.broadcast_to(jnp.exp(p["log_std"]), (B, act))
    new_memory = mem[:B, :d["enc_hidden"]]

    # forward() returns (critic(goals, states, actions), dist); memory extra.
    return value, (mean, std), new_memory


# ----------------------------------------------------------------------------
# Pure-JAX (f32) reference of the same padded math for sanity checking.
# ----------------------------------------------------------------------------
def reference_forward(model, goals, states, memory):
  d = model.dims
  p = model.params
  f32 = jnp.float32
  up = lambda a: a.astype(f32)
  q = lambda a: a.astype(model.param_dtype).astype(f32)   # mimic in-kernel bf16 cast
  B = states.shape[0]

  enc = jnp.tanh(q(states) @ up(p["w_es"]) + q(memory) @ up(p["w_em"]) + p["b_e"])
  g = jnp.maximum(q(goals) @ up(p["w_g"]) + p["b_g"], 0.0)
  mean = jnp.tanh(g @ up(p["w_ag"]) + enc @ up(p["w_ae"]) + p["b_a"])
  h = jnp.maximum(
      g @ up(p["w_cg"]) + enc @ up(p["w_ce"]) + mean @ up(p["w_ca"]) + p["b_c1"],
      0.0)
  value = jnp.sum(h * p["w_c2"], axis=-1, keepdims=True) + p["b_c2"][0, 0]

  act = d["action_dim"]
  std = jnp.broadcast_to(jnp.exp(p["log_std"]), (B, act))
  return value, (mean[:, :act], std), enc[:, :d["enc_hidden"]]


if __name__ == "__main__":
  B = 2
  GOAL_DIM, STATE_DIM, MEMORY_DIM = 8, 16, 32
  ENC_HIDDEN, GOAL_HIDDEN, ACTION_DIM, CRITIC_HIDDEN = 32, 32, 4, 32

  key = jax.random.PRNGKey(0)
  k_model, k_g, k_s, k_m = jax.random.split(key, 4)

  model = ActorCriticPallas(
      k_model,
      goal_dim=GOAL_DIM, state_dim=STATE_DIM, memory_dim=MEMORY_DIM,
      enc_hidden=ENC_HIDDEN, goal_hidden=GOAL_HIDDEN,
      action_dim=ACTION_DIM, critic_hidden=CRITIC_HIDDEN,
      n_agents=1,
  )

  goals = jax.random.normal(k_g, (B, GOAL_DIM), jnp.float32)
  states = jax.random.normal(k_s, (B, STATE_DIM), jnp.float32)
  memory = jax.random.normal(k_m, (B, MEMORY_DIM), jnp.float32)

  value, (mean, std), new_mem = model.forward(goals, states, memory,
                                              ind=0, a_i=0, ppo=True)
  jax.block_until_ready((value, mean, std, new_mem))

  # Correctness check (kernel uses bf16 MXU operands with f32 accumulation and a
  # bf16 memory output, so tolerances are slightly loosened vs the f32 reference).
  v_ref, (m_ref, s_ref), mem_ref = reference_forward(model, goals, states, memory)
  assert value.shape == (B, 1) and mean.shape == (B, ACTION_DIM)
  assert std.shape == (B, ACTION_DIM) and new_mem.shape == (B, MEMORY_DIM)
  assert jnp.allclose(value, v_ref, atol=2e-2), "value mismatch"
  assert jnp.allclose(mean, m_ref, atol=2e-2), "mean mismatch"
  assert jnp.allclose(std, s_ref, atol=1e-6), "std mismatch"
  assert jnp.allclose(new_mem, mem_ref, atol=2e-2), "memory mismatch"

  print("KERNEL_OK")
</pallas_src>

<mosaic_0001>
module attributes {stable_mosaic.version = 11 : i64} {
  func.func @_ac_forward_kernel(%arg0: i32, %arg1: memref<16x8xf32, #tpu.memory_space<vmem>>, %arg2: memref<16x16xf32, #tpu.memory_space<vmem>>, %arg3: memref<16x32xf32, #tpu.memory_space<vmem>>, %arg4: memref<16x128xbf16, #tpu.memory_space<vmem>>, %arg5: memref<32x128xbf16, #tpu.memory_space<vmem>>, %arg6: memref<1x128xf32, #tpu.memory_space<vmem>>, %arg7: memref<8x128xbf16, #tpu.memory_space<vmem>>, %arg8: memref<1x128xf32, #tpu.memory_space<vmem>>, %arg9: memref<128x128xbf16, #tpu.memory_space<vmem>>, %arg10: memref<128x128xbf16, #tpu.memory_space<vmem>>, %arg11: memref<1x128xf32, #tpu.memory_space<vmem>>, %arg12: memref<128x128xbf16, #tpu.memory_space<vmem>>, %arg13: memref<128x128xbf16, #tpu.memory_space<vmem>>, %arg14: memref<128x128xbf16, #tpu.memory_space<vmem>>, %arg15: memref<1x128xf32, #tpu.memory_space<vmem>>, %arg16: memref<1x128xf32, #tpu.memory_space<vmem>>, %arg17: memref<1x1xf32, #tpu.memory_space<smem>>, %arg18: memref<16x128xf32, #tpu.memory_space<vmem>>, %arg19: memref<16x128xbf16, #tpu.memory_space<vmem>>) attributes {dimension_semantics = [#tpu.dimension_semantics<parallel>], iteration_bounds = array<i64: 1>, scalar_prefetch = 0 : i64, scratch_operands = 0 : i64, tpu.core_type = #tpu.core_type<tc>, window_params = [{transform_indices = @transform_0, window_bounds = array<i64: 16, 8>}, {transform_indices = @transform_1, window_bounds = array<i64: 16, 16>}, {transform_indices = @transform_2, window_bounds = array<i64: 16, 32>}, {pipeline_mode = #tpu.pipeline_mode<synchronous>, transform_indices = @transform_3, window_bounds = array<i64: 16, 128>}, {pipeline_mode = #tpu.pipeline_mode<synchronous>, transform_indices = @transform_4, window_bounds = array<i64: 32, 128>}, {pipeline_mode = #tpu.pipeline_mode<synchronous>, transform_indices = @transform_5, window_bounds = array<i64: 1, 128>}, {pipeline_mode = #tpu.pipeline_mode<synchronous>, transform_indices = @transform_6, window_bounds = array<i64: 8, 128>}, {pipeline_mode = #tpu.pipeline_mode<synchronous>, transform_indices = @transform_7, window_bounds = array<i64: 1, 128>}, {pipeline_mode = #tpu.pipeline_mode<synchronous>, transform_indices = @transform_8, window_bounds = array<i64: 128, 128>}, {pipeline_mode = #tpu.pipeline_mode<synchronous>, transform_indices = @transform_9, window_bounds = array<i64: 128, 128>}, {pipeline_mode = #tpu.pipeline_mode<synchronous>, transform_indices = @transform_10, window_bounds = array<i64: 1, 128>}, {pipeline_mode = #tpu.pipeline_mode<synchronous>, transform_indices = @transform_11, window_bounds = array<i64: 128, 128>}, {pipeline_mode = #tpu.pipeline_mode<synchronous>, transform_indices = @transform_12, window_bounds = array<i64: 128, 128>}, {pipeline_mode = #tpu.pipeline_mode<synchronous>, transform_indices = @transform_13, window_bounds = array<i64: 128, 128>}, {pipeline_mode = #tpu.pipeline_mode<synchronous>, transform_indices = @transform_14, window_bounds = array<i64: 1, 128>}, {pipeline_mode = #tpu.pipeline_mode<synchronous>, transform_indices = @transform_15, window_bounds = array<i64: 1, 128>}, {transform_indices = @transform_16, window_bounds = array<i64: 1, 1>}, {transform_indices = @transform_17, window_bounds = array<i64: 16, 128>}, {transform_indices = @transform_18, window_bounds = array<i64: 16, 128>}]} {
    %c0 = arith.constant 0 : index
    %c0_0 = arith.constant 0 : index
    %0 = vector.load %arg2[%c0, %c0_0] : memref<16x16xf32, #tpu.memory_space<vmem>>, vector<16x16xf32>
    %1 = arith.truncf %0 : vector<16x16xf32> to vector<16x16xbf16>
    %c0_1 = arith.constant 0 : index
    %c0_2 = arith.constant 0 : index
    %2 = vector.load %arg3[%c0_1, %c0_2] : memref<16x32xf32, #tpu.memory_space<vmem>>, vector<16x32xf32>
    %3 = arith.truncf %2 : vector<16x32xf32> to vector<16x32xbf16>
    %c0_3 = arith.constant 0 : index
    %c0_4 = arith.constant 0 : index
    %4 = vector.load %arg1[%c0_3, %c0_4] : memref<16x8xf32, #tpu.memory_space<vmem>>, vector<16x8xf32>
    %5 = arith.truncf %4 : vector<16x8xf32> to vector<16x8xbf16>
    %c0_5 = arith.constant 0 : index
    %c0_6 = arith.constant 0 : index
    %6 = vector.load %arg4[%c0_5, %c0_6] : memref<16x128xbf16, #tpu.memory_space<vmem>>, vector<16x128xbf16>
    %cst = arith.constant dense<0.000000e+00> : vector<16x128xf32>
    %7 = tpu.matmul %1, %6, %cst {dimension_numbers = #tpu.dot_dimension_numbers<[1], [0], [0], [1], [0, 0, 1, 1], [], []>} : vector<16x16xbf16>, vector<16x128xbf16>, vector<16x128xf32> -> vector<16x128xf32>
    %c0_7 = arith.constant 0 : index
    %c0_8 = arith.constant 0 : index
    %8 = vector.load %arg5[%c0_7, %c0_8] : memref<32x128xbf16, #tpu.memory_space<vmem>>, vector<32x128xbf16>
    %cst_9 = arith.constant dense<0.000000e+00> : vector<16x128xf32>
    %9 = tpu.matmul %3, %8, %cst_9 {dimension_numbers = #tpu.dot_dimension_numbers<[1], [0], [0], [1], [0, 0, 1, 1], [], []>} : vector<16x32xbf16>, vector<32x128xbf16>, vector<16x128xf32> -> vector<16x128xf32>
    %10 = arith.addf %7, %9 : vector<16x128xf32>
    %c0_10 = arith.constant 0 : index
    %c0_11 = arith.constant 0 : index
    %11 = vector.load %arg6[%c0_10, %c0_11] : memref<1x128xf32, #tpu.memory_space<vmem>>, vector<1x128xf32>
    %12 = vector.broadcast %11 : vector<1x128xf32> to vector<16x128xf32>
    %13 = arith.addf %10, %12 : vector<16x128xf32>
    %14 = math.tanh %13 : vector<16x128xf32>
    %15 = arith.truncf %14 : vector<16x128xf32> to vector<16x128xbf16>
    %c0_12 = arith.constant 0 : index
    %c0_13 = arith.constant 0 : index
    %16 = vector.load %arg19[%c0_12, %c0_13] : memref<16x128xbf16, #tpu.memory_space<vmem>>, vector<16x128xbf16>
    tpu.vector_store %arg19[%c0_12, %c0_13], %15 {strides = array<i32>} : memref<16x128xbf16, #tpu.memory_space<vmem>>, vector<16x128xbf16>,
    %17 = arith.truncf %14 : vector<16x128xf32> to vector<16x128xbf16>
    %c0_14 = arith.constant 0 : index
    %c0_15 = arith.constant 0 : index
    %18 = vector.load %arg7[%c0_14, %c0_15] : memref<8x128xbf16, #tpu.memory_space<vmem>>, vector<8x128xbf16>
    %cst_16 = arith.constant dense<0.000000e+00> : vector<16x128xf32>
    %19 = tpu.matmul %5, %18, %cst_16 {dimension_numbers = #tpu.dot_dimension_numbers<[1], [0], [0], [1], [0, 0, 1, 1], [], []>} : vector<16x8xbf16>, vector<8x128xbf16>, vector<16x128xf32> -> vector<16x128xf32>
    %c0_17 = arith.constant 0 : index
    %c0_18 = arith.constant 0 : index
    %20 = vector.load %arg8[%c0_17, %c0_18] : memref<1x128xf32, #tpu.memory_space<vmem>>, vector<1x128xf32>
    %21 = vector.broadcast %20 : vector<1x128xf32> to vector<16x128xf32>
    %22 = arith.addf %19, %21 : vector<16x128xf32>
    %cst_19 = arith.constant 0.000000e+00 : f32
    %23 = vector.broadcast %cst_19 : f32 to vector<16x128xf32>
    %24 = arith.maximumf %22, %23 : vector<16x128xf32>
    %25 = arith.truncf %24 : vector<16x128xf32> to vector<16x128xbf16>
    %c0_20 = arith.constant 0 : index
    %c0_21 = arith.constant 0 : index
    %26 = vector.load %arg9[%c0_20, %c0_21] : memref<128x128xbf16, #tpu.memory_space<vmem>>, vector<128x128xbf16>
    %cst_22 = arith.constant dense<0.000000e+00> : vector<16x128xf32>
    %27 = tpu.matmul %25, %26, %cst_22 {dimension_numbers = #tpu.dot_dimension_numbers<[1], [0], [0], [1], [0, 0, 1, 1], [], []>} : vector<16x128xbf16>, vector<128x128xbf16>, vector<16x128xf32> -> vector<16x128xf32>
    %c0_23 = arith.constant 0 : index
    %c0_24 = arith.constant 0 : index
    %28 = vector.load %arg10[%c0_23, %c0_24] : memref<128x128xbf16, #tpu.memory_space<vmem>>, vector<128x128xbf16>
    %cst_25 = arith.constant dense<0.000000e+00> : vector<16x128xf32>
    %29 = tpu.matmul %17, %28, %cst_25 {dimension_numbers = #tpu.dot_dimension_numbers<[1], [0], [0], [1], [0, 0, 1, 1], [], []>} : vector<16x128xbf16>, vector<128x128xbf16>, vector<16x128xf32> -> vector<16x128xf32>
    %30 = arith.addf %27, %29 : vector<16x128xf32>
    %c0_26 = arith.constant 0 : index
    %c0_27 = arith.constant 0 : index
    %31 = vector.load %arg11[%c0_26, %c0_27] : memref<1x128xf32, #tpu.memory_space<vmem>>, vector<1x128xf32>
    %32 = vector.broadcast %31 : vector<1x128xf32> to vector<16x128xf32>
    %33 = arith.addf %30, %32 : vector<16x128xf32>
    %34 = math.tanh %33 : vector<16x128xf32>
    %c0_28 = arith.constant 0 : index
    %c0_29 = arith.constant 0 : index
    %35 = vector.load %arg12[%c0_28, %c0_29] : memref<128x128xbf16, #tpu.memory_space<vmem>>, vector<128x128xbf16>
    %cst_30 = arith.constant dense<0.000000e+00> : vector<16x128xf32>
    %36 = tpu.matmul %25, %35, %cst_30 {dimension_numbers = #tpu.dot_dimension_numbers<[1], [0], [0], [1], [0, 0, 1, 1], [], []>} : vector<16x128xbf16>, vector<128x128xbf16>, vector<16x128xf32> -> vector<16x128xf32>
    %c0_31 = arith.constant 0 : index
    %c0_32 = arith.constant 0 : index
    %37 = vector.load %arg13[%c0_31, %c0_32] : memref<128x128xbf16, #tpu.memory_space<vmem>>, vector<128x128xbf16>
    %cst_33 = arith.constant dense<0.000000e+00> : vector<16x128xf32>
    %38 = tpu.matmul %17, %37, %cst_33 {dimension_numbers = #tpu.dot_dimension_numbers<[1], [0], [0], [1], [0, 0, 1, 1], [], []>} : vector<16x128xbf16>, vector<128x128xbf16>, vector<16x128xf32> -> vector<16x128xf32>
    %39 = arith.addf %36, %38 : vector<16x128xf32>
    %40 = arith.truncf %34 : vector<16x128xf32> to vector<16x128xbf16>
    %c0_34 = arith.constant 0 : index
    %c0_35 = arith.constant 0 : index
    %41 = vector.load %arg14[%c0_34, %c0_35] : memref<128x128xbf16, #tpu.memory_space<vmem>>, vector<128x128xbf16>
    %cst_36 = arith.constant dense<0.000000e+00> : vector<16x128xf32>
    %42 = tpu.matmul %40, %41, %cst_36 {dimension_numbers = #tpu.dot_dimension_numbers<[1], [0], [0], [1], [0, 0, 1, 1], [], []>} : vector<16x128xbf16>, vector<128x128xbf16>, vector<16x128xf32> -> vector<16x128xf32>
    %43 = arith.addf %39, %42 : vector<16x128xf32>
    %c0_37 = arith.constant 0 : index
    %c0_38 = arith.constant 0 : index
    %44 = vector.load %arg15[%c0_37, %c0_38] : memref<1x128xf32, #tpu.memory_space<vmem>>, vector<1x128xf32>
    %45 = vector.broadcast %44 : vector<1x128xf32> to vector<16x128xf32>
    %46 = arith.addf %43, %45 : vector<16x128xf32>
    %cst_39 = arith.constant 0.000000e+00 : f32
    %47 = vector.broadcast %cst_39 : f32 to vector<16x128xf32>
    %48 = arith.maximumf %46, %47 : vector<16x128xf32>
    %c0_40 = arith.constant 0 : index
    %c0_41 = arith.constant 0 : index
    %49 = vector.load %arg16[%c0_40, %c0_41] : memref<1x128xf32, #tpu.memory_space<vmem>>, vector<1x128xf32>
    %50 = vector.broadcast %49 : vector<1x128xf32> to vector<16x128xf32>
    %51 = arith.mulf %48, %50 : vector<16x128xf32>
    %cst_42 = arith.constant dense<0.000000e+00> : vector<16xf32>
    %52 = vector.multi_reduction <add>, %51, %cst_42 [1] : vector<16x128xf32> to vector<16xf32>
    %53 = vector.shape_cast %52 : vector<16xf32> to vector<16x1xf32>
    %c0_43 = arith.constant 0 : index
    %c0_44 = arith.constant 0 : index
    %54 = memref.load %arg17[%c0_43, %c0_44] : memref<1x1xf32, #tpu.memory_space<smem>>
    %55 = vector.broadcast %54 : f32 to vector<16x1xf32>
    %56 = arith.addf %53, %55 : vector<16x1xf32>
    %57 = tpu.iota {dimensions = array<i32: 1>} : vector<16x128xi32>
    %c127_i32 = arith.constant 127 : i32
    %58 = vector.broadcast %c127_i32 : i32 to vector<16x128xi32>
    %59 = arith.cmpi eq, %57, %58 : vector<16x128xi32>
    %60 = vector.shape_cast %56 : vector<16x1xf32> to vector<16x1xf32>
    %61 = vector.broadcast %60 : vector<16x1xf32> to vector<16x128xf32>
    %62 = arith.select %59, %61, %34 : vector<16x128xi1>, vector<16x128xf32>
    %c0_45 = arith.constant 0 : index
    %c0_46 = arith.constant 0 : index
    %63 = vector.load %arg18[%c0_45, %c0_46] : memref<16x128xf32, #tpu.memory_space<vmem>>, vector<16x128xf32>
    tpu.vector_store %arg18[%c0_45, %c0_46], %62 {strides = array<i32>} : memref<16x128xf32, #tpu.memory_space<vmem>>, vector<16x128xf32>,
    return
  }
  func.func @transform_0(%arg0: i32) -> (i32, i32) {
    %c0_i32 = arith.constant 0 : i32
    %c0_i32_0 = arith.constant 0 : i32
    return %arg0, %c0_i32 : i32, i32
  }
  func.func @transform_1(%arg0: i32) -> (i32, i32) {
    %c0_i32 = arith.constant 0 : i32
    %c0_i32_0 = arith.constant 0 : i32
    return %arg0, %c0_i32 : i32, i32
  }
  func.func @transform_2(%arg0: i32) -> (i32, i32) {
    %c0_i32 = arith.constant 0 : i32
    %c0_i32_0 = arith.constant 0 : i32
    return %arg0, %c0_i32 : i32, i32
  }
  func.func @transform_3(%arg0: i32) -> (i32, i32) {
    %c0_i32 = arith.constant 0 : i32
    %c0_i32_0 = arith.constant 0 : i32
    %c0_i32_1 = arith.constant 0 : i32
    return %c0_i32, %c0_i32_0 : i32, i32
  }
  func.func @transform_4(%arg0: i32) -> (i32, i32) {
    %c0_i32 = arith.constant 0 : i32
    %c0_i32_0 = arith.constant 0 : i32
    %c0_i32_1 = arith.constant 0 : i32
    return %c0_i32, %c0_i32_0 : i32, i32
  }
  func.func @transform_5(%arg0: i32) -> (i32, i32) {
    %c0_i32 = arith.constant 0 : i32
    %c0_i32_0 = arith.constant 0 : i32
    %c0_i32_1 = arith.constant 0 : i32
    return %c0_i32, %c0_i32_0 : i32, i32
  }
  func.func @transform_6(%arg0: i32) -> (i32, i32) {
    %c0_i32 = arith.constant 0 : i32
    %c0_i32_0 = arith.constant 0 : i32
    %c0_i32_1 = arith.constant 0 : i32
    return %c0_i32, %c0_i32_0 : i32, i32
  }
  func.func @transform_7(%arg0: i32) -> (i32, i32) {
    %c0_i32 = arith.constant 0 : i32
    %c0_i32_0 = arith.constant 0 : i32
    %c0_i32_1 = arith.constant 0 : i32
    return %c0_i32, %c0_i32_0 : i32, i32
  }
  func.func @transform_8(%arg0: i32) -> (i32, i32) {
    %c0_i32 = arith.constant 0 : i32
    %c0_i32_0 = arith.constant 0 : i32
    %c0_i32_1 = arith.constant 0 : i32
    return %c0_i32, %c0_i32_0 : i32, i32
  }
  func.func @transform_9(%arg0: i32) -> (i32, i32) {
    %c0_i32 = arith.constant 0 : i32
    %c0_i32_0 = arith.constant 0 : i32
    %c0_i32_1 = arith.constant 0 : i32
    return %c0_i32, %c0_i32_0 : i32, i32
  }
  func.func @transform_10(%arg0: i32) -> (i32, i32) {
    %c0_i32 = arith.constant 0 : i32
    %c0_i32_0 = arith.constant 0 : i32
    %c0_i32_1 = arith.constant 0 : i32
    return %c0_i32, %c0_i32_0 : i32, i32
  }
  func.func @transform_11(%arg0: i32) -> (i32, i32) {
    %c0_i32 = arith.constant 0 : i32
    %c0_i32_0 = arith.constant 0 : i32
    %c0_i32_1 = arith.constant 0 : i32
    return %c0_i32, %c0_i32_0 : i32, i32
  }
  func.func @transform_12(%arg0: i32) -> (i32, i32) {
    %c0_i32 = arith.constant 0 : i32
    %c0_i32_0 = arith.constant 0 : i32
    %c0_i32_1 = arith.constant 0 : i32
    return %c0_i32, %c0_i32_0 : i32, i32
  }
  func.func @transform_13(%arg0: i32) -> (i32, i32) {
    %c0_i32 = arith.constant 0 : i32
    %c0_i32_0 = arith.constant 0 : i32
    %c0_i32_1 = arith.constant 0 : i32
    return %c0_i32, %c0_i32_0 : i32, i32
  }
  func.func @transform_14(%arg0: i32) -> (i32, i32) {
    %c0_i32 = arith.constant 0 : i32
    %c0_i32_0 = arith.constant 0 : i32
    %c0_i32_1 = arith.constant 0 : i32
    return %c0_i32, %c0_i32_0 : i32, i32
  }
  func.func @transform_15(%arg0: i32) -> (i32, i32) {
    %c0_i32 = arith.constant 0 : i32
    %c0_i32_0 = arith.constant 0 : i32
    %c0_i32_1 = arith.constant 0 : i32
    return %c0_i32, %c0_i32_0 : i32, i32
  }
  func.func @transform_16(%arg0: i32) -> (i32, i32) {
    %c0_i32 = arith.constant 0 : i32
    %c0_i32_0 = arith.constant 0 : i32
    %c0_i32_1 = arith.constant 0 : i32
    return %c0_i32, %c0_i32_0 : i32, i32
  }
  func.func @transform_17(%arg0: i32) -> (i32, i32) {
    %c0_i32 = arith.constant 0 : i32
    %c0_i32_0 = arith.constant 0 : i32
    return %arg0, %c0_i32 : i32, i32
  }
  func.func @transform_18(%arg0: i32) -> (i32, i32) {
    %c0_i32 = arith.constant 0 : i32
    %c0_i32_0 = arith.constant 0 : i32
    return %arg0, %c0_i32 : i32, i32
  }
}

</mosaic_0001>

<llo_original>
// kernel: _forward.1
$region0: #{_forward.1}
  #allocation0 [shape = 'u32[]', space=smem, size = 0x4, offset = 0x4, fixed_abs, tag = 'smem constant byte address 0x4 - core index']
  #allocation1 [shape = 'u32[144,128]{1,0:T(1,128)}', space=vmem, size = 0x12000, scoped, tag = 'internal scratch']
  #allocation2 [shape = 'f32[1,1]{1,0:T(1,128)S(6)}', space=smem, size = 0x200, scoped, tag = 'scoped memory for _forward.1']
  %s0 = inlined_call_operand.vmem [shape: f32[16,8], index: 0, kind: input, shape index: {}]
  %s1 = inlined_call_operand.vmem [shape: f32[16,16], index: 1, kind: input, shape index: {}]
  %s2 = inlined_call_operand.vmem [shape: f32[16,32], index: 2, kind: input, shape index: {}]
  %s3 = inlined_call_operand.vmem [shape: bf16[16,128], index: 3, kind: input, shape index: {}]
  %s4 = inlined_call_operand.vmem [shape: bf16[32,128], index: 4, kind: input, shape index: {}]
  %s5 = inlined_call_operand.hbm [shape: f32[1,128], index: 5, kind: input, shape index: {}]
  %s6 = inlined_call_operand.hbm [shape: bf16[8,128], index: 6, kind: input, shape index: {}]
  %s7 = inlined_call_operand.hbm [shape: f32[1,128], index: 7, kind: input, shape index: {}]
  %s8 = inlined_call_operand.vmem [shape: bf16[128,128], index: 8, kind: input, shape index: {}]
  %s9 = inlined_call_operand.hbm [shape: bf16[128,128], index: 9, kind: input, shape index: {}]
  %s10 = inlined_call_operand.hbm [shape: f32[1,128], index: 10, kind: input, shape index: {}]
  %s11 = inlined_call_operand.hbm [shape: bf16[128,128], index: 11, kind: input, shape index: {}]
  %s12 = inlined_call_operand.hbm [shape: bf16[128,128], index: 12, kind: input, shape index: {}]
  %s13 = inlined_call_operand.hbm [shape: bf16[128,128], index: 13, kind: input, shape index: {}]
  %s14 = inlined_call_operand.hbm [shape: f32[1,128], index: 14, kind: input, shape index: {}]
  %s15 = inlined_call_operand.hbm [shape: f32[1,128], index: 15, kind: input, shape index: {}]
  %s16 = inlined_call_operand.<no memory space> [shape: f32[1,1], index: 16, kind: input, shape index: {}]
  %s17 = inlined_call_operand.vmem [shape: f32[16,128], index: 17, kind: output, shape index: {0}]
  %s18 = inlined_call_operand.vmem [shape: bf16[16,128], index: 18, kind: output, shape index: {1}]
  %19 = xla_tuple %s17, %s18
  %s20 = sld [smem:[#allocation0]]
  $region126: #{_forward.1} parent=0
    _
  %s22 = ssub.s32 1, %s20
  %s23 = scalar_select 0, %s22, %s20
  %24 = sst [smem:[#allocation2]] %s16
  $region1: #{_forward.1} parent=0
    #allocation3 [shape = 'u8[512]{0}', space=vmem, size = 0x400, scoped, tag = 'input window, operand 5, single buffered']
    #allocation4 [shape = 's32[1]{0}', space=sflag, size = 0x4, scoped, tag = 'scoped memory for _forward.1']
    #allocation5 [shape = 'u8[2048]{0}', space=vmem, size = 0x800, scoped, tag = 'input window, operand 6, single buffered']
    #allocation6 [shape = 's32[1]{0}', space=sflag, size = 0x4, scoped, tag = 'scoped memory for _forward.1']
    #allocation7 [shape = 'u8[512]{0}', space=vmem, size = 0x400, scoped, tag = 'input window, operand 7, single buffered']
    #allocation8 [shape = 'u8[32768]{0}', space=vmem, size = 0x8000, scoped, tag = 'input window, operand 9, single buffered']
    #allocation9 [shape = 's32[1]{0}', space=sflag, size = 0x4, scoped, tag = 'scoped memory for _forward.1']
    #allocation10 [shape = 'u8[512]{0}', space=vmem, size = 0x400, scoped, tag = 'input window, operand 10, single buffered']
    #allocation11 [shape = 'u8[32768]{0}', space=vmem, size = 0x8000, scoped, tag = 'input window, operand 11, single buffered']
    #allocation12 [shape = 's32[1]{0}', space=sflag, size = 0x4, scoped, tag = 'scoped memory for _forward.1']
    #allocation13 [shape = 'u8[32768]{0}', space=vmem, size = 0x8000, scoped, tag = 'input window, operand 12, single buffered']
    #allocation14 [shape = 'u8[32768]{0}', space=vmem, size = 0x8000, scoped, tag = 'input window, operand 13, single buffered']
    #allocation15 [shape = 's32[1]{0}', space=sflag, size = 0x4, scoped, tag = 'scoped memory for _forward.1']
    #allocation16 [shape = 'u8[512]{0}', space=vmem, size = 0x400, scoped, tag = 'input window, operand 14, single buffered']
    #allocation17 [shape = 'u8[512]{0}', space=vmem, size = 0x400, scoped, tag = 'input window, operand 15, single buffered']
    #allocation18 [shape = 's32[1]{0}', space=sflag, size = 0x4, scoped, tag = 'scoped memory for _forward.1']
    %25 = vsyncpa [#allocation4], 0
    %26 = vsyncpa [#allocation6], 0
    %27 = vsyncpa [#allocation9], 0
    %28 = vsyncpa [#allocation12], 0
    %29 = vsyncpa [#allocation15], 0
    %30 = vsyncpa [#allocation18], 0
    // Predicated region
    $region2: #{_forward.1} parent=1 // pred_check
      _
    $region3: #{_forward.1} parent=1 // pred_check_branch
      %32 = sbr.rel (0) target = $region5
    $region4: #{_forward.1} parent=1 // pred_region
      _
    $region5: #{_forward.1} parent=1 // pred_fallthru
      _
    // Predicated region
    $region6: #{_forward.1} parent=1 // pred_check
      _
    $region7: #{_forward.1} parent=1 // pred_check_branch
      %34 = sbr.rel (0) target = $region9
    $region8: #{_forward.1} parent=1 // pred_region
      _
    $region9: #{_forward.1} parent=1 // pred_fallthru
      _
    // Predicated region
    $region10: #{_forward.1} parent=1 // pred_check
      _
    $region11: #{_forward.1} parent=1 // pred_check_branch
      %36 = sbr.rel (0) target = $region13
    $region12: #{_forward.1} parent=1 // pred_region
      _
    $region13: #{_forward.1} parent=1 // pred_fallthru
      _
    // Predicated region
    $region14: #{_forward.1} parent=1 // pred_check
      _
    $region15: #{_forward.1} parent=1 // pred_check_branch
      %38 = sbr.rel (0) target = $region17
    $region16: #{_forward.1} parent=1 // pred_region
      _
    $region17: #{_forward.1} parent=1 // pred_fallthru
      _
    // Predicated region
    $region18: #{_forward.1} parent=1 // pred_check
      _
    $region19: #{_forward.1} parent=1 // pred_check_branch
      %40 = sbr.rel (0) target = $region21
    $region20: #{_forward.1} parent=1 // pred_region
      _
    $region21: #{_forward.1} parent=1 // pred_fallthru
      _
    // Predicated region
    $region22: #{_forward.1} parent=1 // pred_check
      _
    $region23: #{_forward.1} parent=1 // pred_check_branch
      %42 = sbr.rel (0) target = $region25
    $region24: #{_forward.1} parent=1 // pred_region
      %s44 = ssub.s32 16, 16
      %45 = vsyncadd [#allocation4], %s44
      %s47 = sshll.u32 [#allocation3], 4
      %s48 = int_to_ptr.vmem [resolvable:$true] %s47
      %50 = dma.hbm_to_vmem [thread:$0]  %s5, 16, %s48, [#allocation4]
    $region25: #{_forward.1} parent=1 // pred_fallthru
      _
    // Predicated region
    $region26: #{_forward.1} parent=1 // pred_check
      _
    $region27: #{_forward.1} parent=1 // pred_check_branch
      %52 = sbr.rel (0) target = $region29
    $region28: #{_forward.1} parent=1 // pred_region
      %s54 = ssub.s32 64, 64
      %55 = vsyncadd [#allocation6], %s54
      %s57 = sshll.u32 [#allocation5], 4
      %s58 = int_to_ptr.vmem [resolvable:$true] %s57
      %60 = dma.hbm_to_vmem [thread:$0]  %s6, 64, %s58, [#allocation6]
    $region29: #{_forward.1} parent=1 // pred_fallthru
      _
    // Predicated region
    $region30: #{_forward.1} parent=1 // pred_check
      _
    $region31: #{_forward.1} parent=1 // pred_check_branch
      %62 = sbr.rel (0) target = $region33
    $region32: #{_forward.1} parent=1 // pred_region
      %s64 = ssub.s32 16, 16
      %65 = vsyncadd [#allocation6], %s64
      %s67 = sshll.u32 [#allocation7], 4
      %s68 = int_to_ptr.vmem [resolvable:$true] %s67
      %70 = dma.hbm_to_vmem [thread:$0]  %s7, 16, %s68, [#allocation6]
    $region33: #{_forward.1} parent=1 // pred_fallthru
      _
    // Predicated region
    $region34: #{_forward.1} parent=1 // pred_check
      _
    $region35: #{_forward.1} parent=1 // pred_check_branch
      %72 = sbr.rel (0) target = $region37
    $region36: #{_forward.1} parent=1 // pred_region
      _
    $region37: #{_forward.1} parent=1 // pred_fallthru
      _
    // Predicated region
    $region38: #{_forward.1} parent=1 // pred_check
      _
    $region39: #{_forward.1} parent=1 // pred_check_branch
      %74 = sbr.rel (0) target = $region41
    $region40: #{_forward.1} parent=1 // pred_region
      %s76 = ssub.s32 1024, 1024
      %77 = vsyncadd [#allocation9], %s76
      %s78 = sshll.u32 [#allocation8], 4
      %s79 = int_to_ptr.vmem [resolvable:$true] %s78
      %84 = dma.hbm_to_vmem [thread:$0]  %s9, 1024, %s79, [#allocation9], 64, 64, 4
    $region41: #{_forward.1} parent=1 // pred_fallthru
      _
    // Predicated region
    $region42: #{_forward.1} parent=1 // pred_check
      _
    $region43: #{_forward.1} parent=1 // pred_check_branch
      %86 = sbr.rel (0) target = $region45
    $region44: #{_forward.1} parent=1 // pred_region
      %s88 = ssub.s32 16, 16
      %89 = vsyncadd [#allocation9], %s88
      %s91 = sshll.u32 [#allocation10], 4
      %s92 = int_to_ptr.vmem [resolvable:$true] %s91
      %94 = dma.hbm_to_vmem [thread:$0]  %s10, 16, %s92, [#allocation9]
    $region45: #{_forward.1} parent=1 // pred_fallthru
      _
    // Predicated region
    $region46: #{_forward.1} parent=1 // pred_check
      _
    $region47: #{_forward.1} parent=1 // pred_check_branch
      %96 = sbr.rel (0) target = $region49
    $region48: #{_forward.1} parent=1 // pred_region
      %s98 = ssub.s32 1024, 1024
      %99 = vsyncadd [#allocation12], %s98
      %s100 = sshll.u32 [#allocation11], 4
      %s101 = int_to_ptr.vmem [resolvable:$true] %s100
      %106 = dma.hbm_to_vmem [thread:$0]  %s11, 1024, %s101, [#allocation12], 64, 64, 4
    $region49: #{_forward.1} parent=1 // pred_fallthru
      _
    // Predicated region
    $region50: #{_forward.1} parent=1 // pred_check
      _
    $region51: #{_forward.1} parent=1 // pred_check_branch
      %108 = sbr.rel (0) target = $region53
    $region52: #{_forward.1} parent=1 // pred_region
      %s110 = ssub.s32 1024, 1024
      %111 = vsyncadd [#allocation12], %s110
      %s112 = sshll.u32 [#allocation13], 4
      %s113 = int_to_ptr.vmem [resolvable:$true] %s112
      %118 = dma.hbm_to_vmem [thread:$0]  %s12, 1024, %s113, [#allocation12], 64, 64, 4
    $region53: #{_forward.1} parent=1 // pred_fallthru
      _
    // Predicated region
    $region54: #{_forward.1} parent=1 // pred_check
      _
    $region55: #{_forward.1} parent=1 // pred_check_branch
      %120 = sbr.rel (0) target = $region57
    $region56: #{_forward.1} parent=1 // pred_region
      %s122 = ssub.s32 1024, 1024
      %123 = vsyncadd [#allocation15], %s122
      %s124 = sshll.u32 [#allocation14], 4
      %s125 = int_to_ptr.vmem [resolvable:$true] %s124
      %130 = dma.hbm_to_vmem [thread:$0]  %s13, 1024, %s125, [#allocation15], 64, 64, 4
    $region57: #{_forward.1} parent=1 // pred_fallthru
      _
    // Predicated region
    $region58: #{_forward.1} parent=1 // pred_check
      _
    $region59: #{_forward.1} parent=1 // pred_check_branch
      %132 = sbr.rel (0) target = $region61
    $region60: #{_forward.1} parent=1 // pred_region
      %s134 = ssub.s32 16, 16
      %135 = vsyncadd [#allocation15], %s134
      %s137 = sshll.u32 [#allocation16], 4
      %s138 = int_to_ptr.vmem [resolvable:$true] %s137
      %140 = dma.hbm_to_vmem [thread:$0]  %s14, 16, %s138, [#allocation15]
    $region61: #{_forward.1} parent=1 // pred_fallthru
      _
    // Predicated region
    $region62: #{_forward.1} parent=1 // pred_check
      _
    $region63: #{_forward.1} parent=1 // pred_check_branch
      %142 = sbr.rel (0) target = $region65
    $region64: #{_forward.1} parent=1 // pred_region
      %s144 = ssub.s32 16, 16
      %145 = vsyncadd [#allocation18], %s144
      %s147 = sshll.u32 [#allocation17], 4
      %s148 = int_to_ptr.vmem [resolvable:$true] %s147
      %150 = dma.hbm_to_vmem [thread:$0]  %s15, 16, %s148, [#allocation18]
    $region65: #{_forward.1} parent=1 // pred_fallthru
      _
    // Predicated region
    $region66: #{_forward.1} parent=1 // pred_check
      _
    $region67: #{_forward.1} parent=1 // pred_check_branch
      %152 = sbr.rel (0) target = $region69
    $region68: #{_forward.1} parent=1 // pred_region
      _
    $region69: #{_forward.1} parent=1 // pred_fallthru
      _
    // Predicated region
    $region70: #{_forward.1} parent=1 // pred_check
      _
    $region71: #{_forward.1} parent=1 // pred_check_branch
      %154 = sbr.rel (0) target = $region73
    $region72: #{_forward.1} parent=1 // pred_region
      %155 = dma.done [#allocation4], 16
    $region73: #{_forward.1} parent=1 // pred_fallthru
      _
    // Predicated region
    $region74: #{_forward.1} parent=1 // pred_check
      _
    $region75: #{_forward.1} parent=1 // pred_check_branch
      %157 = sbr.rel (0) target = $region77
    $region76: #{_forward.1} parent=1 // pred_region
      %158 = dma.done [#allocation6], 64
    $region77: #{_forward.1} parent=1 // pred_fallthru
      _
    // Predicated region
    $region78: #{_forward.1} parent=1 // pred_check
      _
    $region79: #{_forward.1} parent=1 // pred_check_branch
      %160 = sbr.rel (0) target = $region81
    $region80: #{_forward.1} parent=1 // pred_region
      %161 = dma.done [#allocation6], 16
    $region81: #{_forward.1} parent=1 // pred_fallthru
      _
    // Predicated region
    $region82: #{_forward.1} parent=1 // pred_check
      _
    $region83: #{_forward.1} parent=1 // pred_check_branch
      %163 = sbr.rel (0) target = $region85
    $region84: #{_forward.1} parent=1 // pred_region
      %164 = dma.done [#allocation9], 1024
    $region85: #{_forward.1} parent=1 // pred_fallthru
      _
    // Predicated region
    $region86: #{_forward.1} parent=1 // pred_check
      _
    $region87: #{_forward.1} parent=1 // pred_check_branch
      %166 = sbr.rel (0) target = $region89
    $region88: #{_forward.1} parent=1 // pred_region
      %167 = dma.done [#allocation9], 16
    $region89: #{_forward.1} parent=1 // pred_fallthru
      _
    // Predicated region
    $region90: #{_forward.1} parent=1 // pred_check
      _
    $region91: #{_forward.1} parent=1 // pred_check_branch
      %169 = sbr.rel (0) target = $region93
    $region92: #{_forward.1} parent=1 // pred_region
      %170 = dma.done [#allocation12], 1024
    $region93: #{_forward.1} parent=1 // pred_fallthru
      _
    // Predicated region
    $region94: #{_forward.1} parent=1 // pred_check
      _
    $region95: #{_forward.1} parent=1 // pred_check_branch
      %172 = sbr.rel (0) target = $region97
    $region96: #{_forward.1} parent=1 // pred_region
      %173 = dma.done [#allocation12], 1024
    $region97: #{_forward.1} parent=1 // pred_fallthru
      _
    // Predicated region
    $region98: #{_forward.1} parent=1 // pred_check
      _
    $region99: #{_forward.1} parent=1 // pred_check_branch
      %175 = sbr.rel (0) target = $region101
    $region100: #{_forward.1} parent=1 // pred_region
      %176 = dma.done [#allocation15], 1024
    $region101: #{_forward.1} parent=1 // pred_fallthru
      _
    // Predicated region
    $region102: #{_forward.1} parent=1 // pred_check
      _
    $region103: #{_forward.1} parent=1 // pred_check_branch
      %178 = sbr.rel (0) target = $region105
    $region104: #{_forward.1} parent=1 // pred_region
      %179 = dma.done [#allocation15], 16
    $region105: #{_forward.1} parent=1 // pred_fallthru
      _
    // Predicated region
    $region106: #{_forward.1} parent=1 // pred_check
      _
    $region107: #{_forward.1} parent=1 // pred_check_branch
      %181 = sbr.rel (0) target = $region109
    $region108: #{_forward.1} parent=1 // pred_region
      %182 = dma.done [#allocation18], 16
    $region109: #{_forward.1} parent=1 // pred_fallthru
      _
    %v184 = vld [vmem:[%s1] sm:$0xff]
    %v185 = vld [vmem:[%s1 + $0x8] sm:$0xff]
    %v186 = vpack.c.bf16 %v185, %v184
    %v187 = vld [vmem:[%s2] sm:$0xff]
    %v188 = vld [vmem:[%s2 + $0x8] sm:$0xff]
    %v189 = vpack.c.bf16 %v188, %v187
    %v190 = vld [vmem:[%s0] sm:$0xff]
    %v191 = vld [vmem:[%s0 + $0x8] sm:$0xff]
    %v192 = vpack.c.bf16 %v191, %v190
    %v193 = vld [vmem:[%s3] sm:$0xf]
    %v194 = vld [vmem:[%s3 + $0x4] sm:$0xf]
    %v195 = vld [vmem:[%s4] sm:$0xf]
    %v196 = vld [vmem:[%s4 + $0x4] sm:$0xf]
    %v197 = vld [vmem:[%s4 + $0x8] sm:$0xf]
    %v198 = vld [vmem:[%s4 + $0xc] sm:$0xf]
    %v203 = vunpack.c.l.b16 %v195
    %v204 = vunpack.c.l.b16 %v196
    %v205 = vunpack.c.l.b16 %v197
    %v206 = vunpack.c.l.b16 %v198
    %v207 = vpack.c.b16 %v204, %v203
    %v208 = vpack.c.b16 %v206, %v205
    %vm211 = vcmask 261120
    %v213 = vsel %vm211, %v189, 0
    %215 = vmatprep.subr.bf16.mxu0 0
    %216 = vmatpush1.bf16.msra.mxu0 0
    %217 = vmatprep.subr.bf16.mxu0 0
    %218 = vmatpush1.bf16.msra.mxu0 0
    %219 = vmatprep.subr.bf16.mxu0 0
    %220 = vmatpush1.bf16.msra.mxu0 0
    %221 = vmatprep.subr.bf16.mxu0 0
    %222 = vmatpush1.bf16.msra.mxu0 0
    %223 = vmatprep.subr.bf16.mxu0 0
    %224 = vmatpush1.bf16.msra.mxu0 0
    %225 = vmatprep.subr.bf16.mxu0 0
    %226 = vmatpush1.bf16.msra.mxu0 0
    %227 = vmatprep.subr.bf16.mxu0 0
    %228 = vmatpush1.bf16.msra.mxu0 %v208
    %229 = vmatprep.subr.bf16.mxu0 0
    %230 = vmatpush1.bf16.msra.mxu0 %v207
    %231 = vmatprep.subr.bf16.mxu0 0
    %232 = vmatpush2.bf16.msra.mxu0 0
    %233 = vmatprep.subr.bf16.mxu0 0
    %234 = vmatpush2.bf16.msra.mxu0 0
    %235 = vmatprep.subr.bf16.mxu0 0
    %236 = vmatpush2.bf16.msra.mxu0 0
    %237 = vmatprep.subr.bf16.mxu0 0
    %238 = vmatpush2.bf16.msra.mxu0 0
    %239 = vmatprep.subr.bf16.mxu0 0
    %240 = vmatpush2.bf16.msra.mxu0 0
    %241 = vmatprep.subr.bf16.mxu0 0
    %242 = vmatpush2.bf16.msra.mxu0 0
    %243 = vmatprep.subr.bf16.mxu0 0
    %244 = vmatpush2.bf16.msra.mxu0 0
    %245 = vmatprep.subr.bf16.mxu0 0
    %246 = vmatpush2.bf16.msra.mxu0 0
    %247 = vmatprep.mubr.bf16.mxu0 0
    %248 = vmatmul.mubr.bf16.gmra.mxu0 %v213
    %v249 = vpop.f32.mrf.mxu0
    %v250 = vadd.f32 0.0, %v249
    %v251 = vpop.f32.mrf.mxu0
    %v252 = vpop.f32.mrf.mxu0
    %v253 = vadd.f32 0.0, %v252
    %v254 = vpop.f32.mrf.mxu0
    %255 = vdwg.mxu0
    %v258 = vunpack.c.l.b16 %v193
    %v259 = vunpack.c.l.b16 %v194
    %v260 = vpack.c.b16 %v259, %v258
    %vm262 = vcmask 130048
    %v264 = vsel %vm262, %v186, 0
    %266 = vmatprep.subr.bf16.mxu0 0
    %267 = vmatpush1.bf16.msra.mxu0 0
    %268 = vmatprep.subr.bf16.mxu0 0
    %269 = vmatpush1.bf16.msra.mxu0 0
    %270 = vmatprep.subr.bf16.mxu0 0
    %271 = vmatpush1.bf16.msra.mxu0 0
    %272 = vmatprep.subr.bf16.mxu0 0
    %273 = vmatpush1.bf16.msra.mxu0 0
    %274 = vmatprep.subr.bf16.mxu0 0
    %275 = vmatpush1.bf16.msra.mxu0 0
    %276 = vmatprep.subr.bf16.mxu0 0
    %277 = vmatpush1.bf16.msra.mxu0 0
    %278 = vmatprep.subr.bf16.mxu0 0
    %279 = vmatpush1.bf16.msra.mxu0 0
    %280 = vmatprep.subr.bf16.mxu0 0
    %281 = vmatpush1.bf16.msra.mxu0 %v260
    %282 = vmatprep.subr.bf16.mxu0 0
    %283 = vmatpush2.bf16.msra.mxu0 0
    %284 = vmatprep.subr.bf16.mxu0 0
    %285 = vmatpush2.bf16.msra.mxu0 0
    %286 = vmatprep.subr.bf16.mxu0 0
    %287 = vmatpush2.bf16.msra.mxu0 0
    %288 = vmatprep.subr.bf16.mxu0 0
    %289 = vmatpush2.bf16.msra.mxu0 0
    %290 = vmatprep.subr.bf16.mxu0 0
    %291 = vmatpush2.bf16.msra.mxu0 0
    %292 = vmatprep.subr.bf16.mxu0 0
    %293 = vmatpush2.bf16.msra.mxu0 0
    %294 = vmatprep.subr.bf16.mxu0 0
    %295 = vmatpush2.bf16.msra.mxu0 0
    %296 = vmatprep.subr.bf16.mxu0 0
    %297 = vmatpush2.bf16.msra.mxu0 0
    %298 = vmatprep.mubr.bf16.mxu0 0
    %299 = vmatmul.mubr.bf16.gmra.mxu0 %v264
    %v300 = vpop.f32.mrf.mxu0
    %v301 = vadd.f32 %v250, %v300
    %v302 = vpop.f32.mrf.mxu0
    %v303 = vpop.f32.mrf.mxu0
    %v304 = vadd.f32 %v253, %v303
    %v305 = vpop.f32.mrf.mxu0
    %306 = vdwg.mxu0
    %v307 = vld [vmem:[#allocation3] sm:$0x1]
    %v309 = vlaneseq
    %v310 = vshrl.u32 %v309, 7
    %v311 = vsub.s32 0, %v310
    %v312 = vrot.slane %v307, %v311
    %v314 = vadd.f32 %v301, %v312
    %v315 = vadd.f32 %v304, %v312
    %v316 = vtanh.pop %v314
    %v317 = vtanh.pop %v315
    %v318 = vpack.c.bf16 %v317, %v316
    %v320 = vunpack.c.l.b16 %v318
    %v321 = vunpack.c.h.b16 %v318
    %v322 = vpack.c.b16 %v320, %v320
    %v323 = vpack.c.b16 %v321, %v321
    %326 = vst [vmem:[%s18] sm:$0xf] %v322
    %327 = vst [vmem:[%s18 + $0x4] sm:$0xf] %v323
    %v328 = vld [vmem:[#allocation5] sm:$0xf]
    %v329 = vld [vmem:[#allocation7] sm:$0x1]
    %v331 = vlaneseq
    %v332 = vshrl.u32 %v331, 7
    %v333 = vsub.s32 0, %v332
    %v334 = vrot.slane %v329, %v333
    %vm336 = vcmask 64512
    %v338 = vsel %vm336, %v192, 0
    %vm340 = vcmask 1043456
    %v342 = vsel %vm340, %v328, 0
    %344 = vmatprep.subr.bf16.mxu0 0
    %345 = vmatpush1.bf16.msra.mxu0 0
    %346 = vmatprep.subr.bf16.mxu0 0
    %347 = vmatpush1.bf16.msra.mxu0 0
    %348 = vmatprep.subr.bf16.mxu0 0
    %349 = vmatpush1.bf16.msra.mxu0 0
    %350 = vmatprep.subr.bf16.mxu0 0
    %351 = vmatpush1.bf16.msra.mxu0 0
    %352 = vmatprep.subr.bf16.mxu0 0
    %353 = vmatpush1.bf16.msra.mxu0 0
    %354 = vmatprep.subr.bf16.mxu0 0
    %355 = vmatpush1.bf16.msra.mxu0 0
    %356 = vmatprep.subr.bf16.mxu0 0
    %357 = vmatpush1.bf16.msra.mxu0 0
    %358 = vmatprep.subr.bf16.mxu0 0
    %359 = vmatpush1.bf16.msra.mxu0 %v342
    %360 = vmatprep.subr.bf16.mxu0 0
    %361 = vmatpush2.bf16.msra.mxu0 0
    %362 = vmatprep.subr.bf16.mxu0 0
    %363 = vmatpush2.bf16.msra.mxu0 0
    %364 = vmatprep.subr.bf16.mxu0 0
    %365 = vmatpush2.bf16.msra.mxu0 0
    %366 = vmatprep.subr.bf16.mxu0 0
    %367 = vmatpush2.bf16.msra.mxu0 0
    %368 = vmatprep.subr.bf16.mxu0 0
    %369 = vmatpush2.bf16.msra.mxu0 0
    %370 = vmatprep.subr.bf16.mxu0 0
    %371 = vmatpush2.bf16.msra.mxu0 0
    %372 = vmatprep.subr.bf16.mxu0 0
    %373 = vmatpush2.bf16.msra.mxu0 0
    %374 = vmatprep.subr.bf16.mxu0 0
    %375 = vmatpush2.bf16.msra.mxu0 0
    %376 = vmatprep.mubr.bf16.mxu0 0
    %377 = vmatmul.mubr.bf16.gmra.mxu0 %v338
    %v378 = vpop.f32.mrf.mxu0
    %v379 = vadd.f32 %v334, %v378
    %v380 = vpop.f32.mrf.mxu0
    %v381 = vpop.f32.mrf.mxu0
    %v382 = vadd.f32 %v334, %v381
    %v383 = vpop.f32.mrf.mxu0
    %384 = vdwg.mxu0
    %v385 = vmax.f32 %v379, 0.0
    %v386 = vmax.f32 %v382, 0.0
    %v387 = vpack.c.bf16 %v386, %v385
    %v388 = vld [vmem:[%s8] sm:$0xf]
    %v389 = vld [vmem:[%s8 + $0x4] sm:$0xf]
    %v390 = vld [vmem:[%s8 + $0x8] sm:$0xf]
    %v391 = vld [vmem:[%s8 + $0xc] sm:$0xf]
    %v392 = vld [vmem:[%s8 + $0x10] sm:$0xf]
    %v393 = vld [vmem:[%s8 + $0x14] sm:$0xf]
    %v394 = vld [vmem:[%s8 + $0x18] sm:$0xf]
    %v395 = vld [vmem:[%s8 + $0x1c] sm:$0xf]
    %v396 = vld [vmem:[%s8 + $0x20] sm:$0xf]
    %v397 = vld [vmem:[%s8 + $0x24] sm:$0xf]
    %v398 = vld [vmem:[%s8 + $0x28] sm:$0xf]
    %v399 = vld [vmem:[%s8 + $0x2c] sm:$0xf]
    %v400 = vld [vmem:[%s8 + $0x30] sm:$0xf]
    %v401 = vld [vmem:[%s8 + $0x34] sm:$0xf]
    %v402 = vld [vmem:[%s8 + $0x38] sm:$0xf]
    %v403 = vld [vmem:[%s8 + $0x3c] sm:$0xf]
    %v404 = vld [vmem:[#allocation8] sm:$0xf]
    %v405 = vld [vmem:[#allocation8 + $0x4] sm:$0xf]
    %v406 = vld [vmem:[#allocation8 + $0x8] sm:$0xf]
    %v407 = vld [vmem:[#allocation8 + $0xc] sm:$0xf]
    %v408 = vld [vmem:[#allocation8 + $0x10] sm:$0xf]
    %v409 = vld [vmem:[#allocation8 + $0x14] sm:$0xf]
    %v410 = vld [vmem:[#allocation8 + $0x18] sm:$0xf]
    %v411 = vld [vmem:[#allocation8 + $0x1c] sm:$0xf]
    %v412 = vld [vmem:[#allocation8 + $0x20] sm:$0xf]
    %v413 = vld [vmem:[#allocation8 + $0x24] sm:$0xf]
    %v414 = vld [vmem:[#allocation8 + $0x28] sm:$0xf]
    %v415 = vld [vmem:[#allocation8 + $0x2c] sm:$0xf]
    %v416 = vld [vmem:[#allocation8 + $0x30] sm:$0xf]
    %v417 = vld [vmem:[#allocation8 + $0x34] sm:$0xf]
    %v418 = vld [vmem:[#allocation8 + $0x38] sm:$0xf]
    %v419 = vld [vmem:[#allocation8 + $0x3c] sm:$0xf]
    %v436 = vunpack.c.l.b16 %v404
    %v437 = vunpack.c.l.b16 %v405
    %v438 = vunpack.c.l.b16 %v406
    %v439 = vunpack.c.l.b16 %v407
    %v440 = vunpack.c.l.b16 %v408
    %v441 = vunpack.c.l.b16 %v409
    %v442 = vunpack.c.l.b16 %v410
    %v443 = vunpack.c.l.b16 %v411
    %v444 = vunpack.c.l.b16 %v412
    %v445 = vunpack.c.l.b16 %v413
    %v446 = vunpack.c.l.b16 %v414
    %v447 = vunpack.c.l.b16 %v415
    %v448 = vunpack.c.l.b16 %v416
    %v449 = vunpack.c.l.b16 %v417
    %v450 = vunpack.c.l.b16 %v418
    %v451 = vunpack.c.l.b16 %v419
    %v452 = vpack.c.b16 %v437, %v436
    %v453 = vpack.c.b16 %v439, %v438
    %v454 = vpack.c.b16 %v441, %v440
    %v455 = vpack.c.b16 %v443, %v442
    %v456 = vpack.c.b16 %v445, %v444
    %v457 = vpack.c.b16 %v447, %v446
    %v458 = vpack.c.b16 %v449, %v448
    %v459 = vpack.c.b16 %v451, %v450
    %468 = vmatprep.subr.bf16.mxu0 0
    %469 = vmatpush1.bf16.msra.mxu0 %v459
    %470 = vmatprep.subr.bf16.mxu0 0
    %471 = vmatpush1.bf16.msra.mxu0 %v458
    %472 = vmatprep.subr.bf16.mxu0 0
    %473 = vmatpush1.bf16.msra.mxu0 %v457
    %474 = vmatprep.subr.bf16.mxu0 0
    %475 = vmatpush1.bf16.msra.mxu0 %v456
    %476 = vmatprep.subr.bf16.mxu0 0
    %477 = vmatpush1.bf16.msra.mxu0 %v455
    %478 = vmatprep.subr.bf16.mxu0 0
    %479 = vmatpush1.bf16.msra.mxu0 %v454
    %480 = vmatprep.subr.bf16.mxu0 0
    %481 = vmatpush1.bf16.msra.mxu0 %v453
    %482 = vmatprep.subr.bf16.mxu0 0
    %483 = vmatpush1.bf16.msra.mxu0 %v452
    %484 = vmatprep.subr.bf16.mxu0 0
    %485 = vmatpush2.bf16.msra.mxu0 0
    %486 = vmatprep.subr.bf16.mxu0 0
    %487 = vmatpush2.bf16.msra.mxu0 0
    %488 = vmatprep.subr.bf16.mxu0 0
    %489 = vmatpush2.bf16.msra.mxu0 0
    %490 = vmatprep.subr.bf16.mxu0 0
    %491 = vmatpush2.bf16.msra.mxu0 0
    %492 = vmatprep.subr.bf16.mxu0 0
    %493 = vmatpush2.bf16.msra.mxu0 0
    %494 = vmatprep.subr.bf16.mxu0 0
    %495 = vmatpush2.bf16.msra.mxu0 0
    %496 = vmatprep.subr.bf16.mxu0 0
    %497 = vmatpush2.bf16.msra.mxu0 0
    %498 = vmatprep.subr.bf16.mxu0 0
    %499 = vmatpush2.bf16.msra.mxu0 0
    %500 = vmatprep.mubr.bf16.mxu0 0
    %501 = vmatmul.mubr.bf16.gmra.mxu0 %v318
    %v502 = vpop.f32.mrf.mxu0
    %v503 = vadd.f32 0.0, %v502
    %v504 = vpop.f32.mrf.mxu0
    %v505 = vpop.f32.mrf.mxu0
    %v506 = vadd.f32 0.0, %v505
    %v507 = vpop.f32.mrf.mxu0
    %508 = vdwg.mxu0
    %v525 = vunpack.c.l.b16 %v388
    %v526 = vunpack.c.l.b16 %v389
    %v527 = vunpack.c.l.b16 %v390
    %v528 = vunpack.c.l.b16 %v391
    %v529 = vunpack.c.l.b16 %v392
    %v530 = vunpack.c.l.b16 %v393
    %v531 = vunpack.c.l.b16 %v394
    %v532 = vunpack.c.l.b16 %v395
    %v533 = vunpack.c.l.b16 %v396
    %v534 = vunpack.c.l.b16 %v397
    %v535 = vunpack.c.l.b16 %v398
    %v536 = vunpack.c.l.b16 %v399
    %v537 = vunpack.c.l.b16 %v400
    %v538 = vunpack.c.l.b16 %v401
    %v539 = vunpack.c.l.b16 %v402
    %v540 = vunpack.c.l.b16 %v403
    %v541 = vpack.c.b16 %v526, %v525
    %v542 = vpack.c.b16 %v528, %v527
    %v543 = vpack.c.b16 %v530, %v529
    %v544 = vpack.c.b16 %v532, %v531
    %v545 = vpack.c.b16 %v534, %v533
    %v546 = vpack.c.b16 %v536, %v535
    %v547 = vpack.c.b16 %v538, %v537
    %v548 = vpack.c.b16 %v540, %v539
    %557 = vmatprep.subr.bf16.mxu0 0
    %558 = vmatpush1.bf16.msra.mxu0 %v548
    %559 = vmatprep.subr.bf16.mxu0 0
    %560 = vmatpush1.bf16.msra.mxu0 %v547
    %561 = vmatprep.subr.bf16.mxu0 0
    %562 = vmatpush1.bf16.msra.mxu0 %v546
    %563 = vmatprep.subr.bf16.mxu0 0
    %564 = vmatpush1.bf16.msra.mxu0 %v545
    %565 = vmatprep.subr.bf16.mxu0 0
    %566 = vmatpush1.bf16.msra.mxu0 %v544
    %567 = vmatprep.subr.bf16.mxu0 0
    %568 = vmatpush1.bf16.msra.mxu0 %v543
    %569 = vmatprep.subr.bf16.mxu0 0
    %570 = vmatpush1.bf16.msra.mxu0 %v542
    %571 = vmatprep.subr.bf16.mxu0 0
    %572 = vmatpush1.bf16.msra.mxu0 %v541
    %573 = vmatprep.subr.bf16.mxu0 0
    %574 = vmatpush2.bf16.msra.mxu0 0
    %575 = vmatprep.subr.bf16.mxu0 0
    %576 = vmatpush2.bf16.msra.mxu0 0
    %577 = vmatprep.subr.bf16.mxu0 0
    %578 = vmatpush2.bf16.msra.mxu0 0
    %579 = vmatprep.subr.bf16.mxu0 0
    %580 = vmatpush2.bf16.msra.mxu0 0
    %581 = vmatprep.subr.bf16.mxu0 0
    %582 = vmatpush2.bf16.msra.mxu0 0
    %583 = vmatprep.subr.bf16.mxu0 0
    %584 = vmatpush2.bf16.msra.mxu0 0
    %585 = vmatprep.subr.bf16.mxu0 0
    %586 = vmatpush2.bf16.msra.mxu0 0
    %587 = vmatprep.subr.bf16.mxu0 0
    %588 = vmatpush2.bf16.msra.mxu0 0
    %589 = vmatprep.mubr.bf16.mxu0 0
    %590 = vmatmul.mubr.bf16.gmra.mxu0 %v387
    %v591 = vpop.f32.mrf.mxu0
    %v592 = vadd.f32 %v503, %v591
    %v593 = vpop.f32.mrf.mxu0
    %v594 = vpop.f32.mrf.mxu0
    %v595 = vadd.f32 %v506, %v594
    %v596 = vpop.f32.mrf.mxu0
    %597 = vdwg.mxu0
    %v598 = vld [vmem:[#allocation10] sm:$0x1]
    %v600 = vlaneseq
    %v601 = vshrl.u32 %v600, 7
    %v602 = vsub.s32 0, %v601
    %v603 = vrot.slane %v598, %v602
    %v605 = vadd.f32 %v592, %v603
    %v606 = vadd.f32 %v595, %v603
    %v607 = vtanh.pop %v605
    %v608 = vtanh.pop %v606
    %v609 = vld [vmem:[#allocation11] sm:$0xf]
    %v610 = vld [vmem:[#allocation11 + $0x4] sm:$0xf]
    %v611 = vld [vmem:[#allocation11 + $0x8] sm:$0xf]
    %v612 = vld [vmem:[#allocation11 + $0xc] sm:$0xf]
    %v613 = vld [vmem:[#allocation11 + $0x10] sm:$0xf]
    %v614 = vld [vmem:[#allocation11 + $0x14] sm:$0xf]
    %v615 = vld [vmem:[#allocation11 + $0x18] sm:$0xf]
    %v616 = vld [vmem:[#allocation11 + $0x1c] sm:$0xf]
    %v617 = vld [vmem:[#allocation11 + $0x20] sm:$0xf]
    %v618 = vld [vmem:[#allocation11 + $0x24] sm:$0xf]
    %v619 = vld [vmem:[#allocation11 + $0x28] sm:$0xf]
    %v620 = vld [vmem:[#allocation11 + $0x2c] sm:$0xf]
    %v621 = vld [vmem:[#allocation11 + $0x30] sm:$0xf]
    %v622 = vld [vmem:[#allocation11 + $0x34] sm:$0xf]
    %v623 = vld [vmem:[#allocation11 + $0x38] sm:$0xf]
    %v624 = vld [vmem:[#allocation11 + $0x3c] sm:$0xf]
    %v625 = vld [vmem:[#allocation13] sm:$0xf]
    %v626 = vld [vmem:[#allocation13 + $0x4] sm:$0xf]
    %v627 = vld [vmem:[#allocation13 + $0x8] sm:$0xf]
    %v628 = vld [vmem:[#allocation13 + $0xc] sm:$0xf]
    %v629 = vld [vmem:[#allocation13 + $0x10] sm:$0xf]
    %v630 = vld [vmem:[#allocation13 + $0x14] sm:$0xf]
    %v631 = vld [vmem:[#allocation13 + $0x18] sm:$0xf]
    %v632 = vld [vmem:[#allocation13 + $0x1c] sm:$0xf]
    %v633 = vld [vmem:[#allocation13 + $0x20] sm:$0xf]
    %v634 = vld [vmem:[#allocation13 + $0x24] sm:$0xf]
    %v635 = vld [vmem:[#allocation13 + $0x28] sm:$0xf]
    %v636 = vld [vmem:[#allocation13 + $0x2c] sm:$0xf]
    %v637 = vld [vmem:[#allocation13 + $0x30] sm:$0xf]
    %v638 = vld [vmem:[#allocation13 + $0x34] sm:$0xf]
    %v639 = vld [vmem:[#allocation13 + $0x38] sm:$0xf]
    %v640 = vld [vmem:[#allocation13 + $0x3c] sm:$0xf]
    %v657 = vunpack.c.l.b16 %v625
    %v658 = vunpack.c.l.b16 %v626
    %v659 = vunpack.c.l.b16 %v627
    %v660 = vunpack.c.l.b16 %v628
    %v661 = vunpack.c.l.b16 %v629
    %v662 = vunpack.c.l.b16 %v630
    %v663 = vunpack.c.l.b16 %v631
    %v664 = vunpack.c.l.b16 %v632
    %v665 = vunpack.c.l.b16 %v633
    %v666 = vunpack.c.l.b16 %v634
    %v667 = vunpack.c.l.b16 %v635
    %v668 = vunpack.c.l.b16 %v636
    %v669 = vunpack.c.l.b16 %v637
    %v670 = vunpack.c.l.b16 %v638
    %v671 = vunpack.c.l.b16 %v639
    %v672 = vunpack.c.l.b16 %v640
    %v673 = vpack.c.b16 %v658, %v657
    %v674 = vpack.c.b16 %v660, %v659
    %v675 = vpack.c.b16 %v662, %v661
    %v676 = vpack.c.b16 %v664, %v663
    %v677 = vpack.c.b16 %v666, %v665
    %v678 = vpack.c.b16 %v668, %v667
    %v679 = vpack.c.b16 %v670, %v669
    %v680 = vpack.c.b16 %v672, %v671
    %689 = vmatprep.subr.bf16.mxu0 0
    %690 = vmatpush1.bf16.msra.mxu0 %v680
    %691 = vmatprep.subr.bf16.mxu0 0
    %692 = vmatpush1.bf16.msra.mxu0 %v679
    %693 = vmatprep.subr.bf16.mxu0 0
    %694 = vmatpush1.bf16.msra.mxu0 %v678
    %695 = vmatprep.subr.bf16.mxu0 0
    %696 = vmatpush1.bf16.msra.mxu0 %v677
    %697 = vmatprep.subr.bf16.mxu0 0
    %698 = vmatpush1.bf16.msra.mxu0 %v676
    %699 = vmatprep.subr.bf16.mxu0 0
    %700 = vmatpush1.bf16.msra.mxu0 %v675
    %701 = vmatprep.subr.bf16.mxu0 0
    %702 = vmatpush1.bf16.msra.mxu0 %v674
    %703 = vmatprep.subr.bf16.mxu0 0
    %704 = vmatpush1.bf16.msra.mxu0 %v673
    %705 = vmatprep.subr.bf16.mxu0 0
    %706 = vmatpush2.bf16.msra.mxu0 0
    %707 = vmatprep.subr.bf16.mxu0 0
    %708 = vmatpush2.bf16.msra.mxu0 0
    %709 = vmatprep.subr.bf16.mxu0 0
    %710 = vmatpush2.bf16.msra.mxu0 0
    %711 = vmatprep.subr.bf16.mxu0 0
    %712 = vmatpush2.bf16.msra.mxu0 0
    %713 = vmatprep.subr.bf16.mxu0 0
    %714 = vmatpush2.bf16.msra.mxu0 0
    %715 = vmatprep.subr.bf16.mxu0 0
    %716 = vmatpush2.bf16.msra.mxu0 0
    %717 = vmatprep.subr.bf16.mxu0 0
    %718 = vmatpush2.bf16.msra.mxu0 0
    %719 = vmatprep.subr.bf16.mxu0 0
    %720 = vmatpush2.bf16.msra.mxu0 0
    %721 = vmatprep.mubr.bf16.mxu0 0
    %722 = vmatmul.mubr.bf16.gmra.mxu0 %v318
    %v723 = vpop.f32.mrf.mxu0
    %v724 = vadd.f32 0.0, %v723
    %v725 = vpop.f32.mrf.mxu0
    %v726 = vpop.f32.mrf.mxu0
    %v727 = vadd.f32 0.0, %v726
    %v728 = vpop.f32.mrf.mxu0
    %729 = vdwg.mxu0
    %v746 = vunpack.c.l.b16 %v609
    %v747 = vunpack.c.l.b16 %v610
    %v748 = vunpack.c.l.b16 %v611
    %v749 = vunpack.c.l.b16 %v612
    %v750 = vunpack.c.l.b16 %v613
    %v751 = vunpack.c.l.b16 %v614
    %v752 = vunpack.c.l.b16 %v615
    %v753 = vunpack.c.l.b16 %v616
    %v754 = vunpack.c.l.b16 %v617
    %v755 = vunpack.c.l.b16 %v618
    %v756 = vunpack.c.l.b16 %v619
    %v757 = vunpack.c.l.b16 %v620
    %v758 = vunpack.c.l.b16 %v621
    %v759 = vunpack.c.l.b16 %v622
    %v760 = vunpack.c.l.b16 %v623
    %v761 = vunpack.c.l.b16 %v624
    %v762 = vpack.c.b16 %v747, %v746
    %v763 = vpack.c.b16 %v749, %v748
    %v764 = vpack.c.b16 %v751, %v750
    %v765 = vpack.c.b16 %v753, %v752
    %v766 = vpack.c.b16 %v755, %v754
    %v767 = vpack.c.b16 %v757, %v756
    %v768 = vpack.c.b16 %v759, %v758
    %v769 = vpack.c.b16 %v761, %v760
    %778 = vmatprep.subr.bf16.mxu0 0
    %779 = vmatpush1.bf16.msra.mxu0 %v769
    %780 = vmatprep.subr.bf16.mxu0 0
    %781 = vmatpush1.bf16.msra.mxu0 %v768
    %782 = vmatprep.subr.bf16.mxu0 0
    %783 = vmatpush1.bf16.msra.mxu0 %v767
    %784 = vmatprep.subr.bf16.mxu0 0
    %785 = vmatpush1.bf16.msra.mxu0 %v766
    %786 = vmatprep.subr.bf16.mxu0 0
    %787 = vmatpush1.bf16.msra.mxu0 %v765
    %788 = vmatprep.subr.bf16.mxu0 0
    %789 = vmatpush1.bf16.msra.mxu0 %v764
    %790 = vmatprep.subr.bf16.mxu0 0
    %791 = vmatpush1.bf16.msra.mxu0 %v763
    %792 = vmatprep.subr.bf16.mxu0 0
    %793 = vmatpush1.bf16.msra.mxu0 %v762
    %794 = vmatprep.subr.bf16.mxu0 0
    %795 = vmatpush2.bf16.msra.mxu0 0
    %796 = vmatprep.subr.bf16.mxu0 0
    %797 = vmatpush2.bf16.msra.mxu0 0
    %798 = vmatprep.subr.bf16.mxu0 0
    %799 = vmatpush2.bf16.msra.mxu0 0
    %800 = vmatprep.subr.bf16.mxu0 0
    %801 = vmatpush2.bf16.msra.mxu0 0
    %802 = vmatprep.subr.bf16.mxu0 0
    %803 = vmatpush2.bf16.msra.mxu0 0
    %804 = vmatprep.subr.bf16.mxu0 0
    %805 = vmatpush2.bf16.msra.mxu0 0
    %806 = vmatprep.subr.bf16.mxu0 0
    %807 = vmatpush2.bf16.msra.mxu0 0
    %808 = vmatprep.subr.bf16.mxu0 0
    %809 = vmatpush2.bf16.msra.mxu0 0
    %810 = vmatprep.mubr.bf16.mxu0 0
    %811 = vmatmul.mubr.bf16.gmra.mxu0 %v387
    %v812 = vpop.f32.mrf.mxu0
    %v813 = vadd.f32 %v724, %v812
    %v814 = vpop.f32.mrf.mxu0
    %v815 = vpop.f32.mrf.mxu0
    %v816 = vadd.f32 %v727, %v815
    %v817 = vpop.f32.mrf.mxu0
    %818 = vdwg.mxu0
    %v819 = vpack.c.bf16 %v608, %v607
    %v820 = vld [vmem:[#allocation14] sm:$0xf]
    %v821 = vld [vmem:[#allocation14 + $0x4] sm:$0xf]
    %v822 = vld [vmem:[#allocation14 + $0x8] sm:$0xf]
    %v823 = vld [vmem:[#allocation14 + $0xc] sm:$0xf]
    %v824 = vld [vmem:[#allocation14 + $0x10] sm:$0xf]
    %v825 = vld [vmem:[#allocation14 + $0x14] sm:$0xf]
    %v826 = vld [vmem:[#allocation14 + $0x18] sm:$0xf]
    %v827 = vld [vmem:[#allocation14 + $0x1c] sm:$0xf]
    %v828 = vld [vmem:[#allocation14 + $0x20] sm:$0xf]
    %v829 = vld [vmem:[#allocation14 + $0x24] sm:$0xf]
    %v830 = vld [vmem:[#allocation14 + $0x28] sm:$0xf]
    %v831 = vld [vmem:[#allocation14 + $0x2c] sm:$0xf]
    %v832 = vld [vmem:[#allocation14 + $0x30] sm:$0xf]
    %v833 = vld [vmem:[#allocation14 + $0x34] sm:$0xf]
    %v834 = vld [vmem:[#allocation14 + $0x38] sm:$0xf]
    %v835 = vld [vmem:[#allocation14 + $0x3c] sm:$0xf]
    %v852 = vunpack.c.l.b16 %v820
    %v853 = vunpack.c.l.b16 %v821
    %v854 = vunpack.c.l.b16 %v822
    %v855 = vunpack.c.l.b16 %v823
    %v856 = vunpack.c.l.b16 %v824
    %v857 = vunpack.c.l.b16 %v825
    %v858 = vunpack.c.l.b16 %v826
    %v859 = vunpack.c.l.b16 %v827
    %v860 = vunpack.c.l.b16 %v828
    %v861 = vunpack.c.l.b16 %v829
    %v862 = vunpack.c.l.b16 %v830
    %v863 = vunpack.c.l.b16 %v831
    %v864 = vunpack.c.l.b16 %v832
    %v865 = vunpack.c.l.b16 %v833
    %v866 = vunpack.c.l.b16 %v834
    %v867 = vunpack.c.l.b16 %v835
    %v868 = vpack.c.b16 %v853, %v852
    %v869 = vpack.c.b16 %v855, %v854
    %v870 = vpack.c.b16 %v857, %v856
    %v871 = vpack.c.b16 %v859, %v858
    %v872 = vpack.c.b16 %v861, %v860
    %v873 = vpack.c.b16 %v863, %v862
    %v874 = vpack.c.b16 %v865, %v864
    %v875 = vpack.c.b16 %v867, %v866
    %884 = vmatprep.subr.bf16.mxu0 0
    %885 = vmatpush1.bf16.msra.mxu0 %v875
    %886 = vmatprep.subr.bf16.mxu0 0
    %887 = vmatpush1.bf16.msra.mxu0 %v874
    %888 = vmatprep.subr.bf16.mxu0 0
    %889 = vmatpush1.bf16.msra.mxu0 %v873
    %890 = vmatprep.subr.bf16.mxu0 0
    %891 = vmatpush1.bf16.msra.mxu0 %v872
    %892 = vmatprep.subr.bf16.mxu0 0
    %893 = vmatpush1.bf16.msra.mxu0 %v871
    %894 = vmatprep.subr.bf16.mxu0 0
    %895 = vmatpush1.bf16.msra.mxu0 %v870
    %896 = vmatprep.subr.bf16.mxu0 0
    %897 = vmatpush1.bf16.msra.mxu0 %v869
    %898 = vmatprep.subr.bf16.mxu0 0
    %899 = vmatpush1.bf16.msra.mxu0 %v868
    %900 = vmatprep.subr.bf16.mxu0 0
    %901 = vmatpush2.bf16.msra.mxu0 0
    %902 = vmatprep.subr.bf16.mxu0 0
    %903 = vmatpush2.bf16.msra.mxu0 0
    %904 = vmatprep.subr.bf16.mxu0 0
    %905 = vmatpush2.bf16.msra.mxu0 0
    %906 = vmatprep.subr.bf16.mxu0 0
    %907 = vmatpush2.bf16.msra.mxu0 0
    %908 = vmatprep.subr.bf16.mxu0 0
    %909 = vmatpush2.bf16.msra.mxu0 0
    %910 = vmatprep.subr.bf16.mxu0 0
    %911 = vmatpush2.bf16.msra.mxu0 0
    %912 = vmatprep.subr.bf16.mxu0 0
    %913 = vmatpush2.bf16.msra.mxu0 0
    %914 = vmatprep.subr.bf16.mxu0 0
    %915 = vmatpush2.bf16.msra.mxu0 0
    %916 = vmatprep.mubr.bf16.mxu0 0
    %917 = vmatmul.mubr.bf16.gmra.mxu0 %v819
    %v918 = vpop.f32.mrf.mxu0
    %v919 = vadd.f32 0.0, %v918
    %v920 = vpop.f32.mrf.mxu0
    %v921 = vpop.f32.mrf.mxu0
    %v922 = vadd.f32 0.0, %v921
    %v923 = vpop.f32.mrf.mxu0
    %924 = vdwg.mxu0
    %v925 = vadd.f32 %v813, %v919
    %v926 = vadd.f32 %v816, %v922
    %v927 = vld [vmem:[#allocation16] sm:$0x1]
    %v929 = vlaneseq
    %v930 = vshrl.u32 %v929, 7
    %v931 = vsub.s32 0, %v930
    %v932 = vrot.slane %v927, %v931
    %v934 = vadd.f32 %v925, %v932
    %v935 = vadd.f32 %v926, %v932
    %v936 = vmax.f32 %v934, 0.0
    %v937 = vmax.f32 %v935, 0.0
    %v938 = vld [vmem:[#allocation17] sm:$0x1]
    %v940 = vlaneseq
    %v941 = vshrl.u32 %v940, 7
    %v942 = vsub.s32 0, %v941
    %v943 = vrot.slane %v938, %v942
    %v945 = vmul.f32 %v936, %v943
    %v946 = vmul.f32 %v937, %v943
    %947 = vadd.xlane.f32.xlu0 %v945
    %v948 = vpop.xlane.xlu0 %947
    %949 = vadd.xlane.f32.xlu0 %v946
    %v950 = vpop.xlane.xlu0 %949
    %s951 = sld [smem:[#allocation2]]
    %v952 = vstv %s951
    %v953 = vadd.f32 %v948, %v952
    %v954 = vadd.f32 %v950, %v952
    %v955 = vlaneseq
    %v956 = vand.u32 %v955, 127
    %vm957 = vcmp.eq.s32.totalorder %v956, 127
    %v958 = vsel %vm957, %v953, %v607
    %v959 = vsel %vm957, %v954, %v608
    %960 = vst [vmem:[%s17] sm:$0xff] %v958
    %961 = vst [vmem:[%s17 + $0x8] sm:$0xff] %v959
    // Predicated region
    $region110: #{_forward.1} parent=1 // pred_check
      _
    $region111: #{_forward.1} parent=1 // pred_check_branch
      %963 = sbr.rel (0) target = $region113
    $region112: #{_forward.1} parent=1 // pred_region
      _
    $region113: #{_forward.1} parent=1 // pred_fallthru
      _
    // Predicated region
    $region114: #{_forward.1} parent=1 // pred_check
      _
    $region115: #{_forward.1} parent=1 // pred_check_branch
      %965 = sbr.rel (0) target = $region117
    $region116: #{_forward.1} parent=1 // pred_region
      _
    $region117: #{_forward.1} parent=1 // pred_fallthru
      _
    // Predicated region
    $region118: #{_forward.1} parent=1 // pred_check
      _
    $region119: #{_forward.1} parent=1 // pred_check_branch
      %967 = sbr.rel (0) target = $region121
    $region120: #{_forward.1} parent=1 // pred_region
      _
    $region121: #{_forward.1} parent=1 // pred_fallthru
      _
    // Predicated region
    $region122: #{_forward.1} parent=1 // pred_check
      _
    $region123: #{_forward.1} parent=1 // pred_check_branch
      %969 = sbr.rel (0) target = $region125
    $region124: #{_forward.1} parent=1 // pred_region
      _
    $region125: #{_forward.1} parent=1 // pred_fallthru
      _
    %970 = vsyncpa [#allocation4], 1
    %971 = vsyncpa [#allocation6], 1
    %972 = vsyncpa [#allocation9], 1
    %973 = vsyncpa [#allocation12], 1
    %974 = vsyncpa [#allocation15], 1
    %975 = vsyncpa [#allocation18], 1

</llo_original>
